<compile_context>
chip_gen: v7x
topology: tpu7x:2x2x1
jax: 0.10.0
libtpu: 0.0.40
codegen_flags: <defaults>
</compile_context>

<pallas_src>
import functools

import jax
import jax.numpy as jnp
from jax.experimental import pallas as pl
from jax.experimental.pallas import tpu as pltpu

H = 128          # hidden width (nn.Linear(1,128) / (128,128) / (128,1))
LANE = 128       # TPU lane width
TN_CAP = 8192    # lane-tile cap (multiple of 128); ~18 MiB total VMEM at f32


def _round_up(v, m):
    return ((v + m - 1) // m) * m


def mlp_kernel(x_ref, wpack_ref, w2_ref, w3_ref, b3_ref, o_ref, *, mm_dtype):
    x = x_ref[...]                                        # (1, tn) batch on lanes
    w1 = wpack_ref[:, 0:1]                                # (H, 1)
    b1 = wpack_ref[:, 1:2]                                # (H, 1)
    b2 = wpack_ref[:, 2:3]                                # (H, 1)

    # Layer 1: in_features = 1 -> K=1 outer product on the MXU (keeps the
    # (1,tn)->(128,tn) broadcast off the VPU/XLU).
    h1 = jnp.dot(w1.astype(mm_dtype), x.astype(mm_dtype),
                 preferred_element_type=jnp.float32) + b1
    h1 = jnp.maximum(h1, 0.0)                             # (H, tn)

    # Layer 2: (H,H) x (H,tn) on the MXU.
    h2 = jnp.dot(w2_ref[...].astype(mm_dtype), h1.astype(mm_dtype),
                 preferred_element_type=jnp.float32) + b2
    h2 = jnp.maximum(h2, 0.0)                             # (H, tn)

    # Layer 3: out_features = 1 -> (1,H) x (H,tn) row matmul on the MXU
    # (replaces the VPU multiply + 16-deep sublane reduction tree).
    z = jnp.dot(w3_ref[...].astype(mm_dtype), h2.astype(mm_dtype),
                preferred_element_type=jnp.float32) + b3_ref[0, 0]  # (1, tn)

    o_ref[...] = jax.nn.sigmoid(z)                        # lane-dense store


def model_d_forward(x, params, *, tn=None, matmul_dtype=jnp.float32):
    """x: (N, 1) float32 -> (N, 1) float32."""
    w1, b1, w2, b2, w3, b3 = params
    N = x.shape[0]

    # ---- lane-tile selection ---------------------------------------------
    if tn is None:
        if N <= LANE:
            tn = N                            # single full-extent block
        else:
            # >= 2 grid steps (lets v7x shard the "parallel" axis across both
            # TensorCores); tiles are multiples of 128 and capped so per-step
            # work dwarfs the ~0.35us fixed grid-step overhead.
            tn = min(TN_CAP, _round_up(-(-N // 2), LANE))
    elif tn < N:
        tn = max(LANE, (tn // LANE) * LANE)   # block lane-dim must be 128*k
    else:
        tn = N

    # ---- wrapper-side layout / padding -------------------------------------
    x_row = x.reshape(1, N)                   # batch on lanes (lane-dense I/O)
    n_pad = _round_up(N, tn) if tn < N else N
    if n_pad != N:
        # Zero padding is benign (sigmoid(b3)=0.5 in dead lanes, sliced away);
        # avoids garbage lanes flowing through the partial last block.
        x_row = jnp.pad(x_row, ((0, 0), (0, n_pad - N)))
    grid = (n_pad // tn,)

    wpack = jnp.concatenate([w1, b1, b2], axis=1)   # (H, 3): one param tile/DMA
    w3_row = w3.reshape(1, H)                       # (1, H) row (no in-kernel T)

    # ---- VMEM budget (weights use constant index_maps -> fetched once; kept
    #      conservatively double-buffered in the budget) ---------------------
    tile_bytes = 4 * tn
    param_bytes = 4 * (H * H + H * LANE + 8 * LANE)   # w2 + lane-padded wpack + w3 row
    vmem_limit = int(
        2 * 2 * tile_bytes            # x + out tiles, double-buffered
        + 2 * H * tile_bytes          # h1/h2 f32 intermediates
        + 2 * param_bytes             # parameters (conservative)
        + (8 << 20)                   # compiler scratch headroom
    )

    full = lambda i: (0, 0)           # parameters are not tiled across the grid
    kernel = functools.partial(mlp_kernel, mm_dtype=matmul_dtype)
    out = pl.pallas_call(
        kernel,
        out_shape=jax.ShapeDtypeStruct((1, n_pad), jnp.float32),
        grid_spec=pltpu.PrefetchScalarGridSpec(
            num_scalar_prefetch=0,
            grid=grid,
            in_specs=[
                pl.BlockSpec((1, tn), lambda i: (0, i)),            # x tile
                pl.BlockSpec((H, 3), full),                         # [w1|b1|b2]
                pl.BlockSpec((H, H), full),                         # W2 (out,in)
                pl.BlockSpec((1, H), full),                         # W3 row
                pl.BlockSpec(memory_space=pltpu.MemorySpace.SMEM),  # b3 scalar
            ],
            out_specs=pl.BlockSpec((1, tn), lambda i: (0, i)),
        ),
        compiler_params=pltpu.CompilerParams(
            dimension_semantics=("parallel",),
            vmem_limit_bytes=vmem_limit,
        ),
    )(x_row, wpack, w2, w3_row, b3)
    return out[:, :N].reshape(N, 1)


def init_params(key):
    """Matches initialize_weights: Linear weight ~ N(0, 0.18), bias = 0."""
    k1, k2, k3 = jax.random.split(key, 3)
    std = 0.18
    w1 = std * jax.random.normal(k1, (H, 1), jnp.float32)    # Linear(1,128).weight
    b1 = jnp.zeros((H, 1), jnp.float32)
    w2 = std * jax.random.normal(k2, (H, H), jnp.float32)    # Linear(128,128).weight (out,in)
    b2 = jnp.zeros((H, 1), jnp.float32)
    w3 = std * jax.random.normal(k3, (H, 1), jnp.float32)    # Linear(128,1).weight^T (column)
    b3 = jnp.zeros((1, 1), jnp.float32)
    return (w1, b1, w2, b2, w3, b3)


def reference_forward(x, params):
    """Plain-JAX reference with identical (torch-style) parameter layout."""
    w1, b1, w2, b2, w3, b3 = params
    h1 = jnp.maximum(x @ w1.T + b1.T, 0.0)       # (N,128)
    h2 = jnp.maximum(h1 @ w2.T + b2.T, 0.0)      # (N,128)
    return jax.nn.sigmoid(h2 @ w3 + b3)          # (N,1)


if __name__ == "__main__":
    key = jax.random.PRNGKey(0)
    kx, kp = jax.random.split(key)
    params = init_params(kp)

    # Small single-tile case (tn == N): matches nn.Linear(1, 128) input dim.
    N = 8
    x = jax.random.normal(kx, (N, 1), jnp.float32)
    out = jax.block_until_ready(model_d_forward(x, params))
    ref = reference_forward(x, params)
    assert out.shape == (N, 1)
    assert jnp.allclose(out, ref, atol=1e-5, rtol=1e-5)

    # Multi-step grid with an explicit tile (exercises lane-dense pipelining).
    N2 = 256
    x2 = jax.random.normal(jax.random.PRNGKey(1), (N2, 1), jnp.float32)
    out2 = jax.block_until_ready(model_d_forward(x2, params, tn=128))
    ref2 = reference_forward(x2, params)
    assert out2.shape == (N2, 1)
    assert jnp.allclose(out2, ref2, atol=1e-5, rtol=1e-5)

    # Auto tile selection + wrapper-side padding (N not a multiple of 128) +
    # >= 2 grid steps (v7x dual-TensorCore path).
    N3 = 1000
    x3 = jax.random.normal(jax.random.PRNGKey(2), (N3, 1), jnp.float32)
    out3 = jax.block_until_ready(model_d_forward(x3, params))
    ref3 = reference_forward(x3, params)
    assert out3.shape == (N3, 1)
    assert jnp.allclose(out3, ref3, atol=1e-5, rtol=1e-5)

    # Optional bf16 MXU operands (f32 accumulation) with a relaxed tolerance.
    out3b = jax.block_until_ready(
        model_d_forward(x3, params, matmul_dtype=jnp.bfloat16))
    assert jnp.max(jnp.abs(out3b - ref3)) < 5e-2

    print("KERNEL_OK")
</pallas_src>

<mosaic_0001>
module attributes {stable_mosaic.version = 11 : i64} {
  func.func @mlp_kernel(%arg0: i32, %arg1: memref<1x8xf32, #tpu.memory_space<vmem>>, %arg2: memref<128x3xf32, #tpu.memory_space<vmem>>, %arg3: memref<128x128xf32, #tpu.memory_space<vmem>>, %arg4: memref<1x128xf32, #tpu.memory_space<vmem>>, %arg5: memref<1x1xf32, #tpu.memory_space<smem>>, %arg6: memref<1x8xf32, #tpu.memory_space<vmem>>) attributes {dimension_semantics = [#tpu.dimension_semantics<parallel>], iteration_bounds = array<i64: 1>, scalar_prefetch = 0 : i64, scratch_operands = 0 : i64, tpu.core_type = #tpu.core_type<tc>, window_params = [{transform_indices = @transform_0, window_bounds = array<i64: 1, 8>}, {pipeline_mode = #tpu.pipeline_mode<synchronous>, transform_indices = @transform_1, window_bounds = array<i64: 128, 3>}, {pipeline_mode = #tpu.pipeline_mode<synchronous>, transform_indices = @transform_2, window_bounds = array<i64: 128, 128>}, {pipeline_mode = #tpu.pipeline_mode<synchronous>, transform_indices = @transform_3, window_bounds = array<i64: 1, 128>}, {transform_indices = @transform_4, window_bounds = array<i64: 1, 1>}, {transform_indices = @transform_5, window_bounds = array<i64: 1, 8>}]} {
    %c0 = arith.constant 0 : index
    %c0_0 = arith.constant 0 : index
    %0 = vector.load %arg1[%c0, %c0_0] : memref<1x8xf32, #tpu.memory_space<vmem>>, vector<1x8xf32>
    %c0_1 = arith.constant 0 : index
    %c0_2 = arith.constant 0 : index
    %1 = vector.load %arg2[%c0_1, %c0_2] : memref<128x3xf32, #tpu.memory_space<vmem>>, vector<128x1xf32>
    %c0_3 = arith.constant 0 : index
    %c1 = arith.constant 1 : index
    %2 = vector.load %arg2[%c0_3, %c1] : memref<128x3xf32, #tpu.memory_space<vmem>>, vector<128x1xf32>
    %c0_4 = arith.constant 0 : index
    %c2 = arith.constant 2 : index
    %3 = vector.load %arg2[%c0_4, %c2] : memref<128x3xf32, #tpu.memory_space<vmem>>, vector<128x1xf32>
    %cst = arith.constant dense<0.000000e+00> : vector<128x8xf32>
    %4 = tpu.matmul %1, %0, %cst {dimension_numbers = #tpu.dot_dimension_numbers<[1], [0], [0], [1], [0, 0, 1, 1], [], []>} : vector<128x1xf32>, vector<1x8xf32>, vector<128x8xf32> -> vector<128x8xf32>
    %5 = vector.broadcast %2 : vector<128x1xf32> to vector<128x8xf32>
    %6 = arith.addf %4, %5 : vector<128x8xf32>
    %cst_5 = arith.constant 0.000000e+00 : f32
    %7 = vector.broadcast %cst_5 : f32 to vector<128x8xf32>
    %8 = arith.maximumf %6, %7 : vector<128x8xf32>
    %c0_6 = arith.constant 0 : index
    %c0_7 = arith.constant 0 : index
    %9 = vector.load %arg3[%c0_6, %c0_7] : memref<128x128xf32, #tpu.memory_space<vmem>>, vector<128x128xf32>
    %cst_8 = arith.constant dense<0.000000e+00> : vector<128x8xf32>
    %10 = tpu.matmul %9, %8, %cst_8 {dimension_numbers = #tpu.dot_dimension_numbers<[1], [0], [0], [1], [0, 0, 1, 1], [], []>} : vector<128x128xf32>, vector<128x8xf32>, vector<128x8xf32> -> vector<128x8xf32>
    %11 = vector.broadcast %3 : vector<128x1xf32> to vector<128x8xf32>
    %12 = arith.addf %10, %11 : vector<128x8xf32>
    %cst_9 = arith.constant 0.000000e+00 : f32
    %13 = vector.broadcast %cst_9 : f32 to vector<128x8xf32>
    %14 = arith.maximumf %12, %13 : vector<128x8xf32>
    %c0_10 = arith.constant 0 : index
    %c0_11 = arith.constant 0 : index
    %15 = vector.load %arg4[%c0_10, %c0_11] : memref<1x128xf32, #tpu.memory_space<vmem>>, vector<1x128xf32>
    %cst_12 = arith.constant dense<0.000000e+00> : vector<1x8xf32>
    %16 = tpu.matmul %15, %14, %cst_12 {dimension_numbers = #tpu.dot_dimension_numbers<[1], [0], [0], [1], [0, 0, 1, 1], [], []>} : vector<1x128xf32>, vector<128x8xf32>, vector<1x8xf32> -> vector<1x8xf32>
    %c0_13 = arith.constant 0 : index
    %c0_14 = arith.constant 0 : index
    %17 = memref.load %arg5[%c0_13, %c0_14] : memref<1x1xf32, #tpu.memory_space<smem>>
    %18 = vector.broadcast %17 : f32 to vector<1x8xf32>
    %19 = arith.addf %16, %18 : vector<1x8xf32>
    %20 = arith.negf %19 : vector<1x8xf32>
    %21 = math.exp %20 : vector<1x8xf32>
    %cst_15 = arith.constant 1.000000e+00 : f32
    %22 = vector.broadcast %cst_15 : f32 to vector<1x8xf32>
    %23 = arith.addf %22, %21 : vector<1x8xf32>
    %24 = arith.divf %22, %23 : vector<1x8xf32>
    %c0_16 = arith.constant 0 : index
    %c0_17 = arith.constant 0 : index
    %25 = vector.load %arg6[%c0_16, %c0_17] : memref<1x8xf32, #tpu.memory_space<vmem>>, vector<1x8xf32>
    tpu.vector_store %arg6[%c0_16, %c0_17], %24 {strides = array<i32>} : memref<1x8xf32, #tpu.memory_space<vmem>>, vector<1x8xf32>,
    return
  }
  func.func @transform_0(%arg0: i32) -> (i32, i32) {
    %c0_i32 = arith.constant 0 : i32
    %c0_i32_0 = arith.constant 0 : i32
    return %c0_i32, %arg0 : i32, i32
  }
  func.func @transform_1(%arg0: i32) -> (i32, i32) {
    %c0_i32 = arith.constant 0 : i32
    %c0_i32_0 = arith.constant 0 : i32
    %c0_i32_1 = arith.constant 0 : i32
    return %c0_i32, %c0_i32_0 : i32, i32
  }
  func.func @transform_2(%arg0: i32) -> (i32, i32) {
    %c0_i32 = arith.constant 0 : i32
    %c0_i32_0 = arith.constant 0 : i32
    %c0_i32_1 = arith.constant 0 : i32
    return %c0_i32, %c0_i32_0 : i32, i32
  }
  func.func @transform_3(%arg0: i32) -> (i32, i32) {
    %c0_i32 = arith.constant 0 : i32
    %c0_i32_0 = arith.constant 0 : i32
    %c0_i32_1 = arith.constant 0 : i32
    return %c0_i32, %c0_i32_0 : i32, i32
  }
  func.func @transform_4(%arg0: i32) -> (i32, i32) {
    %c0_i32 = arith.constant 0 : i32
    %c0_i32_0 = arith.constant 0 : i32
    %c0_i32_1 = arith.constant 0 : i32
    return %c0_i32, %c0_i32_0 : i32, i32
  }
  func.func @transform_5(%arg0: i32) -> (i32, i32) {
    %c0_i32 = arith.constant 0 : i32
    %c0_i32_0 = arith.constant 0 : i32
    return %c0_i32, %arg0 : i32, i32
  }
}

</mosaic_0001>

<llo_original>
// kernel: tpu_custom_call.1
$region0: #{tpu_custom_call.1}
  #allocation0 [shape = 'u32[]', space=smem, size = 0x4, offset = 0x4, fixed_abs, tag = 'smem constant byte address 0x4 - core index']
  #allocation1 [shape = 'u32[144,128]{1,0:T(1,128)}', space=vmem, size = 0x12000, scoped, tag = 'internal scratch']
  #allocation2 [shape = 'f32[1,1]{1,0:T(1,128)S(6)}', space=smem, size = 0x200, scoped, tag = 'scoped memory for tpu_custom_call.1']
  %s0 = inlined_call_operand.vmem [shape: f32[1,8], index: 0, kind: input, shape index: {}]
  %s1 = inlined_call_operand.vmem [shape: f32[128,3], index: 1, kind: input, shape index: {}]
  %s2 = inlined_call_operand.vmem [shape: f32[128,128], index: 2, kind: input, shape index: {}]
  %s3 = inlined_call_operand.vmem [shape: f32[1,128], index: 3, kind: input, shape index: {}]
  %s4 = inlined_call_operand.<no memory space> [shape: f32[1,1], index: 4, kind: input, shape index: {}]
  %s5 = inlined_call_operand.hbm [shape: f32[1,8], index: 5, kind: output, shape index: {}]
  %s6 = sld [smem:[#allocation0]]
  $region30: #{tpu_custom_call.1} parent=0
    _
  %s8 = ssub.s32 1, %s6
  %s9 = scalar_select 0, %s8, %s6
  %10 = sst [smem:[#allocation2]] %s4
  $region1: #{tpu_custom_call.1} parent=0
    #allocation3 [shape = 'u8[512]{0}', space=vmem, size = 0x400, scoped, tag = 'output window, operand 0, single buffered']
    #allocation4 [shape = 's32[1]{0}', space=sflag, size = 0x4, scoped, tag = 'scoped memory for tpu_custom_call.1']
    %11 = vsyncpa [#allocation4], 0
    // Predicated region
    $region2: #{tpu_custom_call.1} parent=1 // pred_check
      _
    $region3: #{tpu_custom_call.1} parent=1 // pred_check_branch
      %13 = sbr.rel (0) target = $region5
    $region4: #{tpu_custom_call.1} parent=1 // pred_region
      _
    $region5: #{tpu_custom_call.1} parent=1 // pred_fallthru
      _
    // Predicated region
    $region6: #{tpu_custom_call.1} parent=1 // pred_check
      _
    $region7: #{tpu_custom_call.1} parent=1 // pred_check_branch
      %15 = sbr.rel (0) target = $region9
    $region8: #{tpu_custom_call.1} parent=1 // pred_region
      _
    $region9: #{tpu_custom_call.1} parent=1 // pred_fallthru
      _
    // Predicated region
    $region10: #{tpu_custom_call.1} parent=1 // pred_check
      _
    $region11: #{tpu_custom_call.1} parent=1 // pred_check_branch
      %17 = sbr.rel (0) target = $region13
    $region12: #{tpu_custom_call.1} parent=1 // pred_region
      _
    $region13: #{tpu_custom_call.1} parent=1 // pred_fallthru
      _
    // Predicated region
    $region14: #{tpu_custom_call.1} parent=1 // pred_check
      _
    $region15: #{tpu_custom_call.1} parent=1 // pred_check_branch
      %19 = sbr.rel (0) target = $region17
    $region16: #{tpu_custom_call.1} parent=1 // pred_region
      _
    $region17: #{tpu_custom_call.1} parent=1 // pred_fallthru
      _
    // Predicated region
    $region18: #{tpu_custom_call.1} parent=1 // pred_check
      _
    $region19: #{tpu_custom_call.1} parent=1 // pred_check_branch
      %21 = sbr.rel (0) target = $region21
    $region20: #{tpu_custom_call.1} parent=1 // pred_region
      _
    $region21: #{tpu_custom_call.1} parent=1 // pred_fallthru
      _
    %v22 = vld [vmem:[%s0] sm:$0x1]
    %v23 = vld [vmem:[%s1] sm:$0xff]
    %v24 = vld [vmem:[%s1 + $0x8] sm:$0xff]
    %v25 = vld [vmem:[%s1 + $0x10] sm:$0xff]
    %v26 = vld [vmem:[%s1 + $0x18] sm:$0xff]
    %v27 = vld [vmem:[%s1 + $0x20] sm:$0xff]
    %v28 = vld [vmem:[%s1 + $0x28] sm:$0xff]
    %v29 = vld [vmem:[%s1 + $0x30] sm:$0xff]
    %v30 = vld [vmem:[%s1 + $0x38] sm:$0xff]
    %v31 = vld [vmem:[%s1 + $0x40] sm:$0xff]
    %v32 = vld [vmem:[%s1 + $0x48] sm:$0xff]
    %v33 = vld [vmem:[%s1 + $0x50] sm:$0xff]
    %v34 = vld [vmem:[%s1 + $0x58] sm:$0xff]
    %v35 = vld [vmem:[%s1 + $0x60] sm:$0xff]
    %v36 = vld [vmem:[%s1 + $0x68] sm:$0xff]
    %v37 = vld [vmem:[%s1 + $0x70] sm:$0xff]
    %v38 = vld [vmem:[%s1 + $0x78] sm:$0xff]
    %40 = vset.pattern.permute.xlu0 1
    %41 = vperm.xlu0 %40, %v23
    %v42 = vpop.permute.xlu0 %41
    %45 = vset.pattern.permute.xlu0 1
    %46 = vperm.xlu0 %45, %v24
    %v47 = vpop.permute.xlu0 %46
    %50 = vset.pattern.permute.xlu0 1
    %51 = vperm.xlu0 %50, %v25
    %v52 = vpop.permute.xlu0 %51
    %55 = vset.pattern.permute.xlu0 1
    %56 = vperm.xlu0 %55, %v26
    %v57 = vpop.permute.xlu0 %56
    %60 = vset.pattern.permute.xlu0 1
    %61 = vperm.xlu0 %60, %v27
    %v62 = vpop.permute.xlu0 %61
    %65 = vset.pattern.permute.xlu0 1
    %66 = vperm.xlu0 %65, %v28
    %v67 = vpop.permute.xlu0 %66
    %70 = vset.pattern.permute.xlu0 1
    %71 = vperm.xlu0 %70, %v29
    %v72 = vpop.permute.xlu0 %71
    %75 = vset.pattern.permute.xlu0 1
    %76 = vperm.xlu0 %75, %v30
    %v77 = vpop.permute.xlu0 %76
    %80 = vset.pattern.permute.xlu0 1
    %81 = vperm.xlu0 %80, %v31
    %v82 = vpop.permute.xlu0 %81
    %85 = vset.pattern.permute.xlu0 1
    %86 = vperm.xlu0 %85, %v32
    %v87 = vpop.permute.xlu0 %86
    %90 = vset.pattern.permute.xlu0 1
    %91 = vperm.xlu0 %90, %v33
    %v92 = vpop.permute.xlu0 %91
    %95 = vset.pattern.permute.xlu0 1
    %96 = vperm.xlu0 %95, %v34
    %v97 = vpop.permute.xlu0 %96
    %100 = vset.pattern.permute.xlu0 1
    %101 = vperm.xlu0 %100, %v35
    %v102 = vpop.permute.xlu0 %101
    %105 = vset.pattern.permute.xlu0 1
    %106 = vperm.xlu0 %105, %v36
    %v107 = vpop.permute.xlu0 %106
    %110 = vset.pattern.permute.xlu0 1
    %111 = vperm.xlu0 %110, %v37
    %v112 = vpop.permute.xlu0 %111
    %115 = vset.pattern.permute.xlu0 1
    %116 = vperm.xlu0 %115, %v38
    %v117 = vpop.permute.xlu0 %116
    %vm119 = vcmask 7168
    %v120 = vsel %vm119, %v23, 0
    %v122 = vsel %vm119, %v24, 0
    %v124 = vsel %vm119, %v25, 0
    %v126 = vsel %vm119, %v26, 0
    %v128 = vsel %vm119, %v27, 0
    %v130 = vsel %vm119, %v28, 0
    %v132 = vsel %vm119, %v29, 0
    %v134 = vsel %vm119, %v30, 0
    %v136 = vsel %vm119, %v31, 0
    %v138 = vsel %vm119, %v32, 0
    %v140 = vsel %vm119, %v33, 0
    %v142 = vsel %vm119, %v34, 0
    %v144 = vsel %vm119, %v35, 0
    %v146 = vsel %vm119, %v36, 0
    %v148 = vsel %vm119, %v37, 0
    %v150 = vsel %vm119, %v38, 0
    %vm152 = vcmask 1040384
    %v154 = vsel %vm152, %v22, 0
    %156 = vmatprep.subr.mxu0 0.0
    %157 = vmatpush1.msra.mxu0 %v154
    %158 = vmatprep.subr.mxu0 0.0
    %159 = vmatpush1.msra.mxu0 0.0
    %160 = vmatprep.subr.mxu0 0.0
    %161 = vmatpush1.msra.mxu0 0.0
    %162 = vmatprep.subr.mxu0 0.0
    %163 = vmatpush1.msra.mxu0 0.0
    %164 = vmatprep.subr.mxu0 0.0
    %165 = vmatpush1.msra.mxu0 0.0
    %166 = vmatprep.subr.mxu0 0.0
    %167 = vmatpush1.msra.mxu0 0.0
    %168 = vmatprep.subr.mxu0 0.0
    %169 = vmatpush1.msra.mxu0 0.0
    %170 = vmatprep.subr.mxu0 0.0
    %171 = vmatpush1.msra.mxu0 0.0
    %172 = vmatprep.subr.mxu0 0.0
    %173 = vmatpush1.msra.mxu0 0.0
    %174 = vmatprep.subr.mxu0 0.0
    %175 = vmatpush1.msra.mxu0 0.0
    %176 = vmatprep.subr.mxu0 0.0
    %177 = vmatpush1.msra.mxu0 0.0
    %178 = vmatprep.subr.mxu0 0.0
    %179 = vmatpush1.msra.mxu0 0.0
    %180 = vmatprep.subr.mxu0 0.0
    %181 = vmatpush1.msra.mxu0 0.0
    %182 = vmatprep.subr.mxu0 0.0
    %183 = vmatpush1.msra.mxu0 0.0
    %184 = vmatprep.subr.mxu0 0.0
    %185 = vmatpush1.msra.mxu0 0.0
    %186 = vmatprep.subr.mxu0 0.0
    %187 = vmatpush1.msra.mxu0 0.0
    %188 = vmatprep.subr.mxu0 0.0
    %189 = vmatpush1.msra.mxu0 0.0
    %190 = vmatprep.subr.mxu0 0.0
    %191 = vmatpush1.msra.mxu0 0.0
    %192 = vmatprep.subr.mxu0 0.0
    %193 = vmatpush1.msra.mxu0 0.0
    %194 = vmatprep.subr.mxu0 0.0
    %195 = vmatpush1.msra.mxu0 0.0
    %196 = vmatprep.subr.mxu0 0.0
    %197 = vmatpush1.msra.mxu0 0.0
    %198 = vmatprep.subr.mxu0 0.0
    %199 = vmatpush1.msra.mxu0 0.0
    %200 = vmatprep.subr.mxu0 0.0
    %201 = vmatpush1.msra.mxu0 0.0
    %202 = vmatprep.subr.mxu0 0.0
    %203 = vmatpush1.msra.mxu0 0.0
    %204 = vmatprep.subr.mxu0 0.0
    %205 = vmatpush1.msra.mxu0 0.0
    %206 = vmatprep.subr.mxu0 0.0
    %207 = vmatpush1.msra.mxu0 0.0
    %208 = vmatprep.subr.mxu0 0.0
    %209 = vmatpush1.msra.mxu0 0.0
    %210 = vmatprep.subr.mxu0 0.0
    %211 = vmatpush1.msra.mxu0 0.0
    %212 = vmatprep.subr.mxu0 0.0
    %213 = vmatpush1.msra.mxu0 0.0
    %214 = vmatprep.subr.mxu0 0.0
    %215 = vmatpush1.msra.mxu0 0.0
    %216 = vmatprep.subr.mxu0 0.0
    %217 = vmatpush1.msra.mxu0 0.0
    %218 = vmatprep.subr.mxu0 0.0
    %219 = vmatpush1.msra.mxu0 0.0
    %220 = vmatprep.mubr.f32.mxu0 0.0
    %221 = vmatmul.mubr.f32.gmra.mrb[0].mxu0 %v120
    %v222 = vpop.f32.mrb[0].mxu0
    %v223 = vadd.f32 %v42, %v222
    %v224 = vpop.f32.mrb[0].mxu0
    %225 = vmatprep.mubr.f32.mxu0 0.0
    %226 = vmatmul.mubr.f32.gmra.mrb[0].mxu0 %v122
    %v227 = vpop.f32.mrb[0].mxu0
    %v228 = vadd.f32 %v47, %v227
    %v229 = vpop.f32.mrb[0].mxu0
    %230 = vmatprep.mubr.f32.mxu0 0.0
    %231 = vmatmul.mubr.f32.gmra.mrb[0].mxu0 %v124
    %v232 = vpop.f32.mrb[0].mxu0
    %v233 = vadd.f32 %v52, %v232
    %v234 = vpop.f32.mrb[0].mxu0
    %235 = vmatprep.mubr.f32.mxu0 0.0
    %236 = vmatmul.mubr.f32.gmra.mrb[0].mxu0 %v126
    %v237 = vpop.f32.mrb[0].mxu0
    %v238 = vadd.f32 %v57, %v237
    %v239 = vpop.f32.mrb[0].mxu0
    %240 = vmatprep.mubr.f32.mxu0 0.0
    %241 = vmatmul.mubr.f32.gmra.mrb[0].mxu0 %v128
    %v242 = vpop.f32.mrb[0].mxu0
    %v243 = vadd.f32 %v62, %v242
    %v244 = vpop.f32.mrb[0].mxu0
    %245 = vmatprep.mubr.f32.mxu0 0.0
    %246 = vmatmul.mubr.f32.gmra.mrb[0].mxu0 %v130
    %v247 = vpop.f32.mrb[0].mxu0
    %v248 = vadd.f32 %v67, %v247
    %v249 = vpop.f32.mrb[0].mxu0
    %250 = vmatprep.mubr.f32.mxu0 0.0
    %251 = vmatmul.mubr.f32.gmra.mrb[0].mxu0 %v132
    %v252 = vpop.f32.mrb[0].mxu0
    %v253 = vadd.f32 %v72, %v252
    %v254 = vpop.f32.mrb[0].mxu0
    %255 = vmatprep.mubr.f32.mxu0 0.0
    %256 = vmatmul.mubr.f32.gmra.mrb[0].mxu0 %v134
    %v257 = vpop.f32.mrb[0].mxu0
    %v258 = vadd.f32 %v77, %v257
    %v259 = vpop.f32.mrb[0].mxu0
    %260 = vmatprep.mubr.f32.mxu0 0.0
    %261 = vmatmul.mubr.f32.gmra.mrb[0].mxu0 %v136
    %v262 = vpop.f32.mrb[0].mxu0
    %v263 = vadd.f32 %v82, %v262
    %v264 = vpop.f32.mrb[0].mxu0
    %265 = vmatprep.mubr.f32.mxu0 0.0
    %266 = vmatmul.mubr.f32.gmra.mrb[0].mxu0 %v138
    %v267 = vpop.f32.mrb[0].mxu0
    %v268 = vadd.f32 %v87, %v267
    %v269 = vpop.f32.mrb[0].mxu0
    %270 = vmatprep.mubr.f32.mxu0 0.0
    %271 = vmatmul.mubr.f32.gmra.mrb[0].mxu0 %v140
    %v272 = vpop.f32.mrb[0].mxu0
    %v273 = vadd.f32 %v92, %v272
    %v274 = vpop.f32.mrb[0].mxu0
    %275 = vmatprep.mubr.f32.mxu0 0.0
    %276 = vmatmul.mubr.f32.gmra.mrb[0].mxu0 %v142
    %v277 = vpop.f32.mrb[0].mxu0
    %v278 = vadd.f32 %v97, %v277
    %v279 = vpop.f32.mrb[0].mxu0
    %280 = vmatprep.mubr.f32.mxu0 0.0
    %281 = vmatmul.mubr.f32.gmra.mrb[0].mxu0 %v144
    %v282 = vpop.f32.mrb[0].mxu0
    %v283 = vadd.f32 %v102, %v282
    %v284 = vpop.f32.mrb[0].mxu0
    %285 = vmatprep.mubr.f32.mxu0 0.0
    %286 = vmatmul.mubr.f32.gmra.mrb[0].mxu0 %v146
    %v287 = vpop.f32.mrb[0].mxu0
    %v288 = vadd.f32 %v107, %v287
    %v289 = vpop.f32.mrb[0].mxu0
    %290 = vmatprep.mubr.f32.mxu0 0.0
    %291 = vmatmul.mubr.f32.gmra.mrb[0].mxu0 %v148
    %v292 = vpop.f32.mrb[0].mxu0
    %v293 = vadd.f32 %v112, %v292
    %v294 = vpop.f32.mrb[0].mxu0
    %295 = vmatprep.mubr.f32.mxu0 0.0
    %296 = vmatmul.mubr.f32.gmra.mrb[0].mxu0 %v150
    %v297 = vpop.f32.mrb[0].mxu0
    %v298 = vadd.f32 %v117, %v297
    %v299 = vpop.f32.mrb[0].mxu0
    %300 = vdwg.mxu0
    %v301 = vmax.f32 %v223, 0.0
    %v302 = vmax.f32 %v228, 0.0
    %v303 = vmax.f32 %v233, 0.0
    %v304 = vmax.f32 %v238, 0.0
    %v305 = vmax.f32 %v243, 0.0
    %v306 = vmax.f32 %v248, 0.0
    %v307 = vmax.f32 %v253, 0.0
    %v308 = vmax.f32 %v258, 0.0
    %v309 = vmax.f32 %v263, 0.0
    %v310 = vmax.f32 %v268, 0.0
    %v311 = vmax.f32 %v273, 0.0
    %v312 = vmax.f32 %v278, 0.0
    %v313 = vmax.f32 %v283, 0.0
    %v314 = vmax.f32 %v288, 0.0
    %v315 = vmax.f32 %v293, 0.0
    %v316 = vmax.f32 %v298, 0.0
    %v317 = vld [vmem:[%s2] sm:$0xff]
    %v318 = vld [vmem:[%s2 + $0x8] sm:$0xff]
    %v319 = vld [vmem:[%s2 + $0x10] sm:$0xff]
    %v320 = vld [vmem:[%s2 + $0x18] sm:$0xff]
    %v321 = vld [vmem:[%s2 + $0x20] sm:$0xff]
    %v322 = vld [vmem:[%s2 + $0x28] sm:$0xff]
    %v323 = vld [vmem:[%s2 + $0x30] sm:$0xff]
    %v324 = vld [vmem:[%s2 + $0x38] sm:$0xff]
    %v325 = vld [vmem:[%s2 + $0x40] sm:$0xff]
    %v326 = vld [vmem:[%s2 + $0x48] sm:$0xff]
    %v327 = vld [vmem:[%s2 + $0x50] sm:$0xff]
    %v328 = vld [vmem:[%s2 + $0x58] sm:$0xff]
    %v329 = vld [vmem:[%s2 + $0x60] sm:$0xff]
    %v330 = vld [vmem:[%s2 + $0x68] sm:$0xff]
    %v331 = vld [vmem:[%s2 + $0x70] sm:$0xff]
    %v332 = vld [vmem:[%s2 + $0x78] sm:$0xff]
    %333 = vset.pattern.permute.xlu0 2
    %334 = vperm.xlu0 %333, %v23
    %v335 = vpop.permute.xlu0 %334
    %337 = vset.pattern.permute.xlu0 2
    %338 = vperm.xlu0 %337, %v24
    %v339 = vpop.permute.xlu0 %338
    %341 = vset.pattern.permute.xlu0 2
    %342 = vperm.xlu0 %341, %v25
    %v343 = vpop.permute.xlu0 %342
    %345 = vset.pattern.permute.xlu0 2
    %346 = vperm.xlu0 %345, %v26
    %v347 = vpop.permute.xlu0 %346
    %349 = vset.pattern.permute.xlu0 2
    %350 = vperm.xlu0 %349, %v27
    %v351 = vpop.permute.xlu0 %350
    %353 = vset.pattern.permute.xlu0 2
    %354 = vperm.xlu0 %353, %v28
    %v355 = vpop.permute.xlu0 %354
    %357 = vset.pattern.permute.xlu0 2
    %358 = vperm.xlu0 %357, %v29
    %v359 = vpop.permute.xlu0 %358
    %361 = vset.pattern.permute.xlu0 2
    %362 = vperm.xlu0 %361, %v30
    %v363 = vpop.permute.xlu0 %362
    %365 = vset.pattern.permute.xlu0 2
    %366 = vperm.xlu0 %365, %v31
    %v367 = vpop.permute.xlu0 %366
    %369 = vset.pattern.permute.xlu0 2
    %370 = vperm.xlu0 %369, %v32
    %v371 = vpop.permute.xlu0 %370
    %373 = vset.pattern.permute.xlu0 2
    %374 = vperm.xlu0 %373, %v33
    %v375 = vpop.permute.xlu0 %374
    %377 = vset.pattern.permute.xlu0 2
    %378 = vperm.xlu0 %377, %v34
    %v379 = vpop.permute.xlu0 %378
    %381 = vset.pattern.permute.xlu0 2
    %382 = vperm.xlu0 %381, %v35
    %v383 = vpop.permute.xlu0 %382
    %385 = vset.pattern.permute.xlu0 2
    %386 = vperm.xlu0 %385, %v36
    %v387 = vpop.permute.xlu0 %386
    %389 = vset.pattern.permute.xlu0 2
    %390 = vperm.xlu0 %389, %v37
    %v391 = vpop.permute.xlu0 %390
    %393 = vset.pattern.permute.xlu0 2
    %394 = vperm.xlu0 %393, %v38
    %v395 = vpop.permute.xlu0 %394
    %397 = vmatprep.subr.mxu0 0.0
    %398 = vmatpush1.msra.mxu0 %v301
    %399 = vmatprep.subr.mxu0 0.0
    %400 = vmatpush1.msra.mxu0 %v302
    %401 = vmatprep.subr.mxu0 0.0
    %402 = vmatpush1.msra.mxu0 %v303
    %403 = vmatprep.subr.mxu0 0.0
    %404 = vmatpush1.msra.mxu0 %v304
    %405 = vmatprep.subr.mxu0 0.0
    %406 = vmatpush1.msra.mxu0 %v305
    %407 = vmatprep.subr.mxu0 0.0
    %408 = vmatpush1.msra.mxu0 %v306
    %409 = vmatprep.subr.mxu0 0.0
    %410 = vmatpush1.msra.mxu0 %v307
    %411 = vmatprep.subr.mxu0 0.0
    %412 = vmatpush1.msra.mxu0 %v308
    %413 = vmatprep.subr.mxu0 0.0
    %414 = vmatpush1.msra.mxu0 %v309
    %415 = vmatprep.subr.mxu0 0.0
    %416 = vmatpush1.msra.mxu0 %v310
    %417 = vmatprep.subr.mxu0 0.0
    %418 = vmatpush1.msra.mxu0 %v311
    %419 = vmatprep.subr.mxu0 0.0
    %420 = vmatpush1.msra.mxu0 %v312
    %421 = vmatprep.subr.mxu0 0.0
    %422 = vmatpush1.msra.mxu0 %v313
    %423 = vmatprep.subr.mxu0 0.0
    %424 = vmatpush1.msra.mxu0 %v314
    %425 = vmatprep.subr.mxu0 0.0
    %426 = vmatpush1.msra.mxu0 %v315
    %427 = vmatprep.subr.mxu0 0.0
    %428 = vmatpush1.msra.mxu0 %v316
    %429 = vmatprep.subr.mxu0 0.0
    %430 = vmatpush1.msra.mxu0 0.0
    %431 = vmatprep.subr.mxu0 0.0
    %432 = vmatpush1.msra.mxu0 0.0
    %433 = vmatprep.subr.mxu0 0.0
    %434 = vmatpush1.msra.mxu0 0.0
    %435 = vmatprep.subr.mxu0 0.0
    %436 = vmatpush1.msra.mxu0 0.0
    %437 = vmatprep.subr.mxu0 0.0
    %438 = vmatpush1.msra.mxu0 0.0
    %439 = vmatprep.subr.mxu0 0.0
    %440 = vmatpush1.msra.mxu0 0.0
    %441 = vmatprep.subr.mxu0 0.0
    %442 = vmatpush1.msra.mxu0 0.0
    %443 = vmatprep.subr.mxu0 0.0
    %444 = vmatpush1.msra.mxu0 0.0
    %445 = vmatprep.subr.mxu0 0.0
    %446 = vmatpush1.msra.mxu0 0.0
    %447 = vmatprep.subr.mxu0 0.0
    %448 = vmatpush1.msra.mxu0 0.0
    %449 = vmatprep.subr.mxu0 0.0
    %450 = vmatpush1.msra.mxu0 0.0
    %451 = vmatprep.subr.mxu0 0.0
    %452 = vmatpush1.msra.mxu0 0.0
    %453 = vmatprep.subr.mxu0 0.0
    %454 = vmatpush1.msra.mxu0 0.0
    %455 = vmatprep.subr.mxu0 0.0
    %456 = vmatpush1.msra.mxu0 0.0
    %457 = vmatprep.subr.mxu0 0.0
    %458 = vmatpush1.msra.mxu0 0.0
    %459 = vmatprep.subr.mxu0 0.0
    %460 = vmatpush1.msra.mxu0 0.0
    %461 = vmatprep.mubr.f32.mxu0 0.0
    %462 = vmatmul.mubr.f32.gmra.mrb[0].mxu0 %v317
    %v463 = vpop.f32.mrb[0].mxu0
    %v464 = vadd.f32 %v335, %v463
    %v465 = vpop.f32.mrb[0].mxu0
    %466 = vmatprep.mubr.f32.mxu0 0.0
    %467 = vmatmul.mubr.f32.gmra.mrb[0].mxu0 %v318
    %v468 = vpop.f32.mrb[0].mxu0
    %v469 = vadd.f32 %v339, %v468
    %v470 = vpop.f32.mrb[0].mxu0
    %471 = vmatprep.mubr.f32.mxu0 0.0
    %472 = vmatmul.mubr.f32.gmra.mrb[0].mxu0 %v319
    %v473 = vpop.f32.mrb[0].mxu0
    %v474 = vadd.f32 %v343, %v473
    %v475 = vpop.f32.mrb[0].mxu0
    %476 = vmatprep.mubr.f32.mxu0 0.0
    %477 = vmatmul.mubr.f32.gmra.mrb[0].mxu0 %v320
    %v478 = vpop.f32.mrb[0].mxu0
    %v479 = vadd.f32 %v347, %v478
    %v480 = vpop.f32.mrb[0].mxu0
    %481 = vmatprep.mubr.f32.mxu0 0.0
    %482 = vmatmul.mubr.f32.gmra.mrb[0].mxu0 %v321
    %v483 = vpop.f32.mrb[0].mxu0
    %v484 = vadd.f32 %v351, %v483
    %v485 = vpop.f32.mrb[0].mxu0
    %486 = vmatprep.mubr.f32.mxu0 0.0
    %487 = vmatmul.mubr.f32.gmra.mrb[0].mxu0 %v322
    %v488 = vpop.f32.mrb[0].mxu0
    %v489 = vadd.f32 %v355, %v488
    %v490 = vpop.f32.mrb[0].mxu0
    %491 = vmatprep.mubr.f32.mxu0 0.0
    %492 = vmatmul.mubr.f32.gmra.mrb[0].mxu0 %v323
    %v493 = vpop.f32.mrb[0].mxu0
    %v494 = vadd.f32 %v359, %v493
    %v495 = vpop.f32.mrb[0].mxu0
    %496 = vmatprep.mubr.f32.mxu0 0.0
    %497 = vmatmul.mubr.f32.gmra.mrb[0].mxu0 %v324
    %v498 = vpop.f32.mrb[0].mxu0
    %v499 = vadd.f32 %v363, %v498
    %v500 = vpop.f32.mrb[0].mxu0
    %501 = vmatprep.mubr.f32.mxu0 0.0
    %502 = vmatmul.mubr.f32.gmra.mrb[0].mxu0 %v325
    %v503 = vpop.f32.mrb[0].mxu0
    %v504 = vadd.f32 %v367, %v503
    %v505 = vpop.f32.mrb[0].mxu0
    %506 = vmatprep.mubr.f32.mxu0 0.0
    %507 = vmatmul.mubr.f32.gmra.mrb[0].mxu0 %v326
    %v508 = vpop.f32.mrb[0].mxu0
    %v509 = vadd.f32 %v371, %v508
    %v510 = vpop.f32.mrb[0].mxu0
    %511 = vmatprep.mubr.f32.mxu0 0.0
    %512 = vmatmul.mubr.f32.gmra.mrb[0].mxu0 %v327
    %v513 = vpop.f32.mrb[0].mxu0
    %v514 = vadd.f32 %v375, %v513
    %v515 = vpop.f32.mrb[0].mxu0
    %516 = vmatprep.mubr.f32.mxu0 0.0
    %517 = vmatmul.mubr.f32.gmra.mrb[0].mxu0 %v328
    %v518 = vpop.f32.mrb[0].mxu0
    %v519 = vadd.f32 %v379, %v518
    %v520 = vpop.f32.mrb[0].mxu0
    %521 = vmatprep.mubr.f32.mxu0 0.0
    %522 = vmatmul.mubr.f32.gmra.mrb[0].mxu0 %v329
    %v523 = vpop.f32.mrb[0].mxu0
    %v524 = vadd.f32 %v383, %v523
    %v525 = vpop.f32.mrb[0].mxu0
    %526 = vmatprep.mubr.f32.mxu0 0.0
    %527 = vmatmul.mubr.f32.gmra.mrb[0].mxu0 %v330
    %v528 = vpop.f32.mrb[0].mxu0
    %v529 = vadd.f32 %v387, %v528
    %v530 = vpop.f32.mrb[0].mxu0
    %531 = vmatprep.mubr.f32.mxu0 0.0
    %532 = vmatmul.mubr.f32.gmra.mrb[0].mxu0 %v331
    %v533 = vpop.f32.mrb[0].mxu0
    %v534 = vadd.f32 %v391, %v533
    %v535 = vpop.f32.mrb[0].mxu0
    %536 = vmatprep.mubr.f32.mxu0 0.0
    %537 = vmatmul.mubr.f32.gmra.mrb[0].mxu0 %v332
    %v538 = vpop.f32.mrb[0].mxu0
    %v539 = vadd.f32 %v395, %v538
    %v540 = vpop.f32.mrb[0].mxu0
    %541 = vdwg.mxu0
    %v542 = vmax.f32 %v464, 0.0
    %v543 = vmax.f32 %v469, 0.0
    %v544 = vmax.f32 %v474, 0.0
    %v545 = vmax.f32 %v479, 0.0
    %v546 = vmax.f32 %v484, 0.0
    %v547 = vmax.f32 %v489, 0.0
    %v548 = vmax.f32 %v494, 0.0
    %v549 = vmax.f32 %v499, 0.0
    %v550 = vmax.f32 %v504, 0.0
    %v551 = vmax.f32 %v509, 0.0
    %v552 = vmax.f32 %v514, 0.0
    %v553 = vmax.f32 %v519, 0.0
    %v554 = vmax.f32 %v524, 0.0
    %v555 = vmax.f32 %v529, 0.0
    %v556 = vmax.f32 %v534, 0.0
    %v557 = vmax.f32 %v539, 0.0
    %v558 = vld [vmem:[%s3] sm:$0x1]
    %s559 = sld [smem:[#allocation2]]
    %v560 = vstv %s559
    %561 = vmatprep.subr.mxu0 0.0
    %562 = vmatpush1.msra.mxu0 %v542
    %563 = vmatprep.subr.mxu0 0.0
    %564 = vmatpush1.msra.mxu0 %v543
    %565 = vmatprep.subr.mxu0 0.0
    %566 = vmatpush1.msra.mxu0 %v544
    %567 = vmatprep.subr.mxu0 0.0
    %568 = vmatpush1.msra.mxu0 %v545
    %569 = vmatprep.subr.mxu0 0.0
    %570 = vmatpush1.msra.mxu0 %v546
    %571 = vmatprep.subr.mxu0 0.0
    %572 = vmatpush1.msra.mxu0 %v547
    %573 = vmatprep.subr.mxu0 0.0
    %574 = vmatpush1.msra.mxu0 %v548
    %575 = vmatprep.subr.mxu0 0.0
    %576 = vmatpush1.msra.mxu0 %v549
    %577 = vmatprep.subr.mxu0 0.0
    %578 = vmatpush1.msra.mxu0 %v550
    %579 = vmatprep.subr.mxu0 0.0
    %580 = vmatpush1.msra.mxu0 %v551
    %581 = vmatprep.subr.mxu0 0.0
    %582 = vmatpush1.msra.mxu0 %v552
    %583 = vmatprep.subr.mxu0 0.0
    %584 = vmatpush1.msra.mxu0 %v553
    %585 = vmatprep.subr.mxu0 0.0
    %586 = vmatpush1.msra.mxu0 %v554
    %587 = vmatprep.subr.mxu0 0.0
    %588 = vmatpush1.msra.mxu0 %v555
    %589 = vmatprep.subr.mxu0 0.0
    %590 = vmatpush1.msra.mxu0 %v556
    %591 = vmatprep.subr.mxu0 0.0
    %592 = vmatpush1.msra.mxu0 %v557
    %593 = vmatprep.subr.mxu0 0.0
    %594 = vmatpush1.msra.mxu0 0.0
    %595 = vmatprep.subr.mxu0 0.0
    %596 = vmatpush1.msra.mxu0 0.0
    %597 = vmatprep.subr.mxu0 0.0
    %598 = vmatpush1.msra.mxu0 0.0
    %599 = vmatprep.subr.mxu0 0.0
    %600 = vmatpush1.msra.mxu0 0.0
    %601 = vmatprep.subr.mxu0 0.0
    %602 = vmatpush1.msra.mxu0 0.0
    %603 = vmatprep.subr.mxu0 0.0
    %604 = vmatpush1.msra.mxu0 0.0
    %605 = vmatprep.subr.mxu0 0.0
    %606 = vmatpush1.msra.mxu0 0.0
    %607 = vmatprep.subr.mxu0 0.0
    %608 = vmatpush1.msra.mxu0 0.0
    %609 = vmatprep.subr.mxu0 0.0
    %610 = vmatpush1.msra.mxu0 0.0
    %611 = vmatprep.subr.mxu0 0.0
    %612 = vmatpush1.msra.mxu0 0.0
    %613 = vmatprep.subr.mxu0 0.0
    %614 = vmatpush1.msra.mxu0 0.0
    %615 = vmatprep.subr.mxu0 0.0
    %616 = vmatpush1.msra.mxu0 0.0
    %617 = vmatprep.subr.mxu0 0.0
    %618 = vmatpush1.msra.mxu0 0.0
    %619 = vmatprep.subr.mxu0 0.0
    %620 = vmatpush1.msra.mxu0 0.0
    %621 = vmatprep.subr.mxu0 0.0
    %622 = vmatpush1.msra.mxu0 0.0
    %623 = vmatprep.subr.mxu0 0.0
    %624 = vmatpush1.msra.mxu0 0.0
    %625 = vmatprep.mubr.f32.mxu0 0.0
    %626 = vmatmul.mubr.f32.gmra.mrb[0].mxu0 %v558
    %v627 = vpop.f32.mrb[0].mxu0
    %v628 = vadd.f32 %v560, %v627
    %v629 = vpop.f32.mrb[0].mxu0
    %630 = vdwg.mxu0
    %v631 = vxor.u32 %v628, 2147483648
    %v632 = vmul.f32 %v631, 1.442695
    %v633 = vpow.pop %v632
    %v634 = vadd.f32 %v633, 1.0
    %v635 = vrcp.pop %v634
    %v636 = vmul.f32 1.0, %v635
    %vm637 = vcmask 57344
    %638 = vst.msk [vmem:[#allocation3] sm:$0x1] %vm637, %v636
    // Predicated region
    $region22: #{tpu_custom_call.1} parent=1 // pred_check
      _
    $region23: #{tpu_custom_call.1} parent=1 // pred_check_branch
      %640 = sbr.rel (0) target = $region25
    $region24: #{tpu_custom_call.1} parent=1 // pred_region
      %s642 = ssub.s32 16, 16
      %643 = vsyncadd [#allocation4], %s642
      %s645 = sshll.u32 [#allocation3], 4
      %s646 = int_to_ptr.vmem [resolvable:$true] %s645
      %648 = dma.vmem_to_hbm [thread:$0]  %s646, 16, %s5, [#allocation4]
    $region25: #{tpu_custom_call.1} parent=1 // pred_fallthru
      _
    // Predicated region
    $region26: #{tpu_custom_call.1} parent=1 // pred_check
      _
    $region27: #{tpu_custom_call.1} parent=1 // pred_check_branch
      %650 = sbr.rel (0) target = $region29
    $region28: #{tpu_custom_call.1} parent=1 // pred_region
      %651 = dma.done [#allocation4], 16
    $region29: #{tpu_custom_call.1} parent=1 // pred_fallthru
      _
    %652 = vsyncpa [#allocation4], 1

</llo_original>
